<compile_context>
chip_gen: v6e
topology: v6e:2x2x1
jax: 0.10.0
libtpu: 0.0.40
codegen_flags: <defaults>
</compile_context>

<pallas_src>
import functools

import numpy as np
import jax
import jax.numpy as jnp
from jax.experimental import pallas as pl
from jax.experimental.pallas import tpu as pltpu

# ----------------------------- model hyper-params ---------------------------
N_NODES    = 16     # total nodes across the batched subgraphs
BATCH      = 2      # number of link-prediction subgraphs in the demo data
MAX_B      = 8      # padded, shape-stable max subgraphs (multiple of 8)
HID        = 32     # hidden_channels
NUM_LAYERS = 3      # SAGEConv layers
MAX_Z      = 10     # z-embedding vocabulary

# misc-slab layout (all rows are H lanes wide, 8-row aligned blocks)
BIAS_ROWS  = 8                       # rows 0..NUM_LAYERS-1 = per-layer bias
LIN1_OFF   = BIAS_ROWS               # rows LIN1_OFF..LIN1_OFF+H-1 = lin1_w
HEAD_OFF   = BIAS_ROWS + HID         # rows: lin1_b, lin2_w(row), lin2_b(bcast)
HEAD_ROWS  = 8                       # padded head block
MISC_ROWS  = HEAD_OFF + HEAD_ROWS    # 48

VMEM = pltpu.MemorySpace.VMEM


# --------------------------------------------------------------------------
# Fused forward kernel.  Everything VMEM-resident; only [MAX_B, 1] hits HBM.
# --------------------------------------------------------------------------
def _sage_fused_kernel(data_ref,    # VMEM [N + 2*MAX_B, N] f32: A_mean | S_src | S_dst
                       z_ref,       # VMEM [N, 1] int32
                       wcat_ref,    # VMEM [L, 2H, H] f32 (layer-0 has E folded in)
                       misc_ref,    # VMEM [MISC_ROWS, H] f32 (biases, lin1, lin2)
                       out_ref,     # VMEM [MAX_B, 1] f32
                       *, num_layers, n, hid, max_b, lin1_off, head_off):
    # ---- unpack the data slab (all slices 8-sublane aligned) ---------------
    a     = data_ref[:n, :]                      # [N, N] mean-aggregation matrix
    s_src = data_ref[n:n + max_b, :]             # [MAX_B, N] one-hot(center)
    s_dst = data_ref[n + max_b:, :]              # [MAX_B, N] one-hot(center+1)

    # ---- padded one-hot of z over H lanes (z < MAX_Z <= H) -----------------
    # The embedding table is folded into wcat[0] host-side, so h starts as
    # the padded one-hot itself (z is 1-D in the reference, so the ndim==3
    # sum branch is a no-op).
    z = z_ref[...]                                                   # [N, 1] int32
    h = (jax.lax.broadcasted_iota(jnp.int32, (n, hid), 1) == z).astype(jnp.float32)

    # ---- SAGEConv stack: ONE fused MXU op per layer -------------------------
    for l in range(num_layers):
        agg = jnp.dot(a, h, preferred_element_type=jnp.float32)     # mean over nbrs
        xin = jnp.concatenate([agg, h], axis=-1)                     # [N, 2H]
        out = (jnp.dot(xin, wcat_ref[l], preferred_element_type=jnp.float32)
               + misc_ref[l:l + 1, :])                               # + bias_l
        if l < num_layers - 1:
            out = jnp.maximum(out, 0.0)        # ReLU; dropout = identity (eval)
        h = out

    # ---- center (src/dst) gather via selection-matrix matmuls ---------------
    x = (jnp.dot(s_src, h, preferred_element_type=jnp.float32)
         * jnp.dot(s_dst, h, preferred_element_type=jnp.float32))    # [MAX_B, H]

    # ---- prediction head: relu(lin1(x)) -> lin2 -----------------------------
    lin1_w = misc_ref[lin1_off:lin1_off + hid, :]                    # [H, H]
    head   = misc_ref[head_off:head_off + 8, :]                      # [8, H]
    t = jnp.maximum(
        jnp.dot(x, lin1_w, preferred_element_type=jnp.float32) + head[0:1, :],
        0.0)
    # lin2 (output width 1): VPU multiply + lane reduction instead of MXU.
    out_ref[...] = (jnp.sum(t * head[1:2, :], axis=-1, keepdims=True)
                    + head[2:3, 0:1])


# --------------------------------------------------------------------------
# Host-side packing (static per weight set): fused/folded weight slabs.
# --------------------------------------------------------------------------
def pack_params(params):
    L, H, Z = NUM_LAYERS, HID, MAX_Z
    emb = params['z_emb_table']                          # [Z, H]
    wl, wr = params['sage_wl'], params['sage_wr']        # [L, H, H]

    # Fold the embedding into layer 0:  h0 = onehot @ E  =>
    #   agg0 @ Wl0 = (A @ onehot) @ (E @ Wl0),  h0 @ Wr0 = onehot @ (E @ Wr0)
    # Zero-pad the Z rows up to H so layer 0 has the same [2H, H] shape.
    ewl0 = jnp.zeros((H, H), jnp.float32).at[:Z, :].set(emb @ wl[0])
    ewr0 = jnp.zeros((H, H), jnp.float32).at[:Z, :].set(emb @ wr[0])
    w0    = jnp.concatenate([ewl0, ewr0], axis=0)[None]  # [1, 2H, H]
    wrest = jnp.concatenate([wl[1:], wr[1:]], axis=1)    # [L-1, 2H, H]
    wcat  = jnp.concatenate([w0, wrest], axis=0)         # [L, 2H, H]

    bias_blk = jnp.zeros((BIAS_ROWS, H), jnp.float32).at[:L, :].set(
        params['sage_b'].reshape(L, H))
    head_blk = jnp.concatenate([
        params['lin1_b'].reshape(1, H),
        params['lin2_w'].reshape(1, H),
        jnp.broadcast_to(params['lin2_b'].reshape(1, 1), (1, H)),
        jnp.zeros((HEAD_ROWS - 3, H), jnp.float32),
    ], axis=0)
    misc = jnp.concatenate([bias_blk, params['lin1_w'], head_blk], axis=0)
    assert misc.shape == (MISC_ROWS, H)
    return wcat, misc


def pack_data(z, edge_index, center, n=N_NODES, max_b=MAX_B):
    """Graph prep glue: dense row-normalized mean matrix + padded one-hot
    selection matrices for the center/center+1 gather."""
    adj = jnp.zeros((n, n), jnp.float32).at[edge_index[1], edge_index[0]].add(1.0)
    a_mean = adj / jnp.maximum(adj.sum(axis=1, keepdims=True), 1.0)

    b = int(center.shape[0])
    assert b <= max_b
    c = jnp.zeros((max_b,), jnp.int32).at[:b].set(jnp.asarray(center, jnp.int32))
    valid = (jnp.arange(max_b) < b)[:, None]
    cols = jax.lax.broadcasted_iota(jnp.int32, (max_b, n), 1)
    s_src = ((cols == c[:, None]) & valid).astype(jnp.float32)
    s_dst = ((cols == (c[:, None] + 1)) & valid).astype(jnp.float32)

    data_slab = jnp.concatenate([a_mean, s_src, s_dst], axis=0)  # [N+2*MAX_B, N]
    z_col = z.reshape(n, 1).astype(jnp.int32)
    return data_slab, z_col


@functools.partial(jax.jit, static_argnames=("b",))
def sage_forward(wcat, misc, data_slab, z_col, b):
    kernel = functools.partial(
        _sage_fused_kernel, num_layers=NUM_LAYERS, n=N_NODES, hid=HID,
        max_b=MAX_B, lin1_off=LIN1_OFF, head_off=HEAD_OFF)
    out = pl.pallas_call(
        kernel,
        out_shape=jax.ShapeDtypeStruct((MAX_B, 1), jnp.float32),
        in_specs=[pl.BlockSpec(memory_space=VMEM)] * 4,
        out_specs=pl.BlockSpec(memory_space=VMEM),
    )(data_slab, z_col, wcat, misc)
    return out[:b]


# --------------------------------------------------------------------------
# Pure-JAX reference (unfused, unfolded) for a correctness sanity check.
# --------------------------------------------------------------------------
def sage_forward_ref(params, z, edge_index, batch_np):
    n = z.shape[0]
    adj = jnp.zeros((n, n), jnp.float32).at[edge_index[1], edge_index[0]].add(1.0)
    a_mean = adj / jnp.maximum(adj.sum(axis=1, keepdims=True), 1.0)
    h = params['z_emb_table'][z]
    for l in range(NUM_LAYERS):
        out = (a_mean @ h) @ params['sage_wl'][l] + h @ params['sage_wr'][l] \
              + params['sage_b'][l]
        h = jnp.maximum(out, 0.0) if l < NUM_LAYERS - 1 else out
    center = np.unique(np.asarray(batch_np), return_index=True)[1]
    x = h[center] * h[center + 1]
    t = jnp.maximum(x @ params['lin1_w'] + params['lin1_b'], 0.0)
    return t @ params['lin2_w'] + params['lin2_b']


# --------------------------------------------------------------------------
# Parameter initialization (deterministic, synthetic).
# --------------------------------------------------------------------------
def init_params(key):
    keys = iter(jax.random.split(key, 16))

    def nrm(shape, scale=0.1):
        return jax.random.normal(next(keys), shape, jnp.float32) * scale

    p = {}
    p['z_emb_table'] = nrm((MAX_Z, HID), 1.0)
    # SAGEConv: lin_l (neighbor, has bias) and lin_r (root, no bias).
    p['sage_wl'] = nrm((NUM_LAYERS, HID, HID))
    p['sage_wr'] = nrm((NUM_LAYERS, HID, HID))
    p['sage_b'] = jnp.zeros((NUM_LAYERS, 1, HID), jnp.float32)
    p['lin1_w'] = nrm((HID, HID))
    p['lin1_b'] = jnp.zeros((1, HID), jnp.float32)
    p['lin2_w'] = nrm((HID, 1))
    p['lin2_b'] = jnp.zeros((1, 1), jnp.float32)
    return p


# --------------------------------------------------------------------------
if __name__ == "__main__":
    key = jax.random.PRNGKey(0)
    k_data, k_params = jax.random.split(key)

    # synthetic "data" contents
    z = jax.random.randint(k_data, (N_NODES,), 0, MAX_Z, dtype=jnp.int32)
    batch_np = np.repeat(np.arange(BATCH), N_NODES // BATCH).astype(np.int32)

    # bidirectional path edges inside each subgraph
    src, dst = [], []
    per = N_NODES // BATCH
    for g in range(BATCH):
        off = g * per
        for i in range(per - 1):
            src += [off + i, off + i + 1]
            dst += [off + i + 1, off + i]
    edge_index = jnp.asarray([src, dst], dtype=jnp.int32)   # [2, E]
    # NOTE: data.edge_weight exists in the reference Data object but SAGEConv
    # is invoked without it, so it does not affect the forward pass.

    params = init_params(k_params)

    # Data-pipeline prep (mirrors np.unique(batch, return_index=True) in torch ref)
    center = np.unique(batch_np, return_index=True)[1].astype(np.int32)
    b = int(center.shape[0])

    wcat, misc = pack_params(params)                 # static per weight set
    data_slab, z_col = pack_data(z, edge_index, center)

    out = sage_forward(wcat, misc, data_slab, z_col, b)
    out = jax.block_until_ready(out)
    assert out.shape == (BATCH, 1) and out.dtype == jnp.float32

    ref = jax.block_until_ready(sage_forward_ref(params, z, edge_index, batch_np))
    assert np.allclose(np.asarray(out), np.asarray(ref), rtol=1e-3, atol=1e-3)

    print("KERNEL_OK")
</pallas_src>

<mosaic_0001>
module attributes {stable_mosaic.version = 11 : i64} {
  func.func @_sage_fused_kernel(%arg0: memref<32x16xf32, #tpu.memory_space<vmem>>, %arg1: memref<16x1xi32, #tpu.memory_space<vmem>>, %arg2: memref<3x64x32xf32, #tpu.memory_space<vmem>>, %arg3: memref<48x32xf32, #tpu.memory_space<vmem>>, %arg4: memref<8x1xf32, #tpu.memory_space<vmem>>) attributes {dimension_semantics = [], scalar_prefetch = 0 : i64, scratch_operands = 0 : i64, tpu.core_type = #tpu.core_type<tc>} {
    %c0 = arith.constant 0 : index
    %c0_0 = arith.constant 0 : index
    %0 = vector.load %arg0[%c0, %c0_0] : memref<32x16xf32, #tpu.memory_space<vmem>>, vector<16x16xf32>
    %c16 = arith.constant 16 : index
    %c0_1 = arith.constant 0 : index
    %1 = vector.load %arg0[%c16, %c0_1] : memref<32x16xf32, #tpu.memory_space<vmem>>, vector<8x16xf32>
    %c24 = arith.constant 24 : index
    %c0_2 = arith.constant 0 : index
    %2 = vector.load %arg0[%c24, %c0_2] : memref<32x16xf32, #tpu.memory_space<vmem>>, vector<8x16xf32>
    %c0_3 = arith.constant 0 : index
    %c0_4 = arith.constant 0 : index
    %3 = vector.load %arg1[%c0_3, %c0_4] : memref<16x1xi32, #tpu.memory_space<vmem>>, vector<16x1xi32>
    %4 = tpu.iota {dimensions = array<i32: 1>} : vector<16x32xi32>
    %5 = vector.broadcast %3 : vector<16x1xi32> to vector<16x32xi32>
    %6 = arith.cmpi eq, %4, %5 : vector<16x32xi32>
    %7 = arith.extui %6 : vector<16x32xi1> to vector<16x32xi32>
    %8 = arith.sitofp %7 : vector<16x32xi32> to vector<16x32xf32>
    %cst = arith.constant dense<0.000000e+00> : vector<16x32xf32>
    %9 = tpu.matmul %0, %8, %cst {dimension_numbers = #tpu.dot_dimension_numbers<[1], [0], [0], [1], [0, 0, 1, 1], [], []>} : vector<16x16xf32>, vector<16x32xf32>, vector<16x32xf32> -> vector<16x32xf32>
    %10 = tpu.concatenate %9, %8 in 1 : vector<16x32xf32>, vector<16x32xf32> -> vector<16x64xf32>
    %c0_5 = arith.constant 0 : index
    %c0_6 = arith.constant 0 : index
    %c0_7 = arith.constant 0 : index
    %11 = vector.load %arg2[%c0_5, %c0_6, %c0_7] : memref<3x64x32xf32, #tpu.memory_space<vmem>>, vector<1x64x32xf32>
    %12 = vector.shape_cast %11 : vector<1x64x32xf32> to vector<64x32xf32>
    %cst_8 = arith.constant dense<0.000000e+00> : vector<16x32xf32>
    %13 = tpu.matmul %10, %12, %cst_8 {dimension_numbers = #tpu.dot_dimension_numbers<[1], [0], [0], [1], [0, 0, 1, 1], [], []>} : vector<16x64xf32>, vector<64x32xf32>, vector<16x32xf32> -> vector<16x32xf32>
    %c0_9 = arith.constant 0 : index
    %c0_10 = arith.constant 0 : index
    %14 = vector.load %arg3[%c0_9, %c0_10] : memref<48x32xf32, #tpu.memory_space<vmem>>, vector<1x32xf32>
    %15 = vector.broadcast %14 : vector<1x32xf32> to vector<16x32xf32>
    %16 = arith.addf %13, %15 : vector<16x32xf32>
    %cst_11 = arith.constant 0.000000e+00 : f32
    %17 = vector.broadcast %cst_11 : f32 to vector<16x32xf32>
    %18 = arith.maximumf %16, %17 : vector<16x32xf32>
    %cst_12 = arith.constant dense<0.000000e+00> : vector<16x32xf32>
    %19 = tpu.matmul %0, %18, %cst_12 {dimension_numbers = #tpu.dot_dimension_numbers<[1], [0], [0], [1], [0, 0, 1, 1], [], []>} : vector<16x16xf32>, vector<16x32xf32>, vector<16x32xf32> -> vector<16x32xf32>
    %20 = tpu.concatenate %19, %18 in 1 : vector<16x32xf32>, vector<16x32xf32> -> vector<16x64xf32>
    %c1 = arith.constant 1 : index
    %c0_13 = arith.constant 0 : index
    %c0_14 = arith.constant 0 : index
    %21 = vector.load %arg2[%c1, %c0_13, %c0_14] : memref<3x64x32xf32, #tpu.memory_space<vmem>>, vector<1x64x32xf32>
    %22 = vector.shape_cast %21 : vector<1x64x32xf32> to vector<64x32xf32>
    %cst_15 = arith.constant dense<0.000000e+00> : vector<16x32xf32>
    %23 = tpu.matmul %20, %22, %cst_15 {dimension_numbers = #tpu.dot_dimension_numbers<[1], [0], [0], [1], [0, 0, 1, 1], [], []>} : vector<16x64xf32>, vector<64x32xf32>, vector<16x32xf32> -> vector<16x32xf32>
    %c1_16 = arith.constant 1 : index
    %c0_17 = arith.constant 0 : index
    %24 = vector.load %arg3[%c1_16, %c0_17] : memref<48x32xf32, #tpu.memory_space<vmem>>, vector<1x32xf32>
    %25 = vector.broadcast %24 : vector<1x32xf32> to vector<16x32xf32>
    %26 = arith.addf %23, %25 : vector<16x32xf32>
    %cst_18 = arith.constant 0.000000e+00 : f32
    %27 = vector.broadcast %cst_18 : f32 to vector<16x32xf32>
    %28 = arith.maximumf %26, %27 : vector<16x32xf32>
    %cst_19 = arith.constant dense<0.000000e+00> : vector<16x32xf32>
    %29 = tpu.matmul %0, %28, %cst_19 {dimension_numbers = #tpu.dot_dimension_numbers<[1], [0], [0], [1], [0, 0, 1, 1], [], []>} : vector<16x16xf32>, vector<16x32xf32>, vector<16x32xf32> -> vector<16x32xf32>
    %30 = tpu.concatenate %29, %28 in 1 : vector<16x32xf32>, vector<16x32xf32> -> vector<16x64xf32>
    %c2 = arith.constant 2 : index
    %c0_20 = arith.constant 0 : index
    %c0_21 = arith.constant 0 : index
    %31 = vector.load %arg2[%c2, %c0_20, %c0_21] : memref<3x64x32xf32, #tpu.memory_space<vmem>>, vector<1x64x32xf32>
    %32 = vector.shape_cast %31 : vector<1x64x32xf32> to vector<64x32xf32>
    %cst_22 = arith.constant dense<0.000000e+00> : vector<16x32xf32>
    %33 = tpu.matmul %30, %32, %cst_22 {dimension_numbers = #tpu.dot_dimension_numbers<[1], [0], [0], [1], [0, 0, 1, 1], [], []>} : vector<16x64xf32>, vector<64x32xf32>, vector<16x32xf32> -> vector<16x32xf32>
    %c2_23 = arith.constant 2 : index
    %c0_24 = arith.constant 0 : index
    %34 = vector.load %arg3[%c2_23, %c0_24] : memref<48x32xf32, #tpu.memory_space<vmem>>, vector<1x32xf32>
    %35 = vector.broadcast %34 : vector<1x32xf32> to vector<16x32xf32>
    %36 = arith.addf %33, %35 : vector<16x32xf32>
    %cst_25 = arith.constant dense<0.000000e+00> : vector<8x32xf32>
    %37 = tpu.matmul %1, %36, %cst_25 {dimension_numbers = #tpu.dot_dimension_numbers<[1], [0], [0], [1], [0, 0, 1, 1], [], []>} : vector<8x16xf32>, vector<16x32xf32>, vector<8x32xf32> -> vector<8x32xf32>
    %cst_26 = arith.constant dense<0.000000e+00> : vector<8x32xf32>
    %38 = tpu.matmul %2, %36, %cst_26 {dimension_numbers = #tpu.dot_dimension_numbers<[1], [0], [0], [1], [0, 0, 1, 1], [], []>} : vector<8x16xf32>, vector<16x32xf32>, vector<8x32xf32> -> vector<8x32xf32>
    %39 = arith.mulf %37, %38 : vector<8x32xf32>
    %c8 = arith.constant 8 : index
    %c0_27 = arith.constant 0 : index
    %40 = vector.load %arg3[%c8, %c0_27] : memref<48x32xf32, #tpu.memory_space<vmem>>, vector<32x32xf32>
    %c40 = arith.constant 40 : index
    %c0_28 = arith.constant 0 : index
    %41 = vector.load %arg3[%c40, %c0_28] : memref<48x32xf32, #tpu.memory_space<vmem>>, vector<8x32xf32>
    %cst_29 = arith.constant dense<0.000000e+00> : vector<8x32xf32>
    %42 = tpu.matmul %39, %40, %cst_29 {dimension_numbers = #tpu.dot_dimension_numbers<[1], [0], [0], [1], [0, 0, 1, 1], [], []>} : vector<8x32xf32>, vector<32x32xf32>, vector<8x32xf32> -> vector<8x32xf32>
    %43 = vector.extract_strided_slice %41 {offsets = [0, 0], sizes = [1, 32], strides = [1, 1]} : vector<8x32xf32> to vector<1x32xf32>
    %44 = vector.broadcast %43 : vector<1x32xf32> to vector<8x32xf32>
    %45 = arith.addf %42, %44 : vector<8x32xf32>
    %cst_30 = arith.constant 0.000000e+00 : f32
    %46 = vector.broadcast %cst_30 : f32 to vector<8x32xf32>
    %47 = arith.maximumf %45, %46 : vector<8x32xf32>
    %48 = vector.extract_strided_slice %41 {offsets = [1, 0], sizes = [1, 32], strides = [1, 1]} : vector<8x32xf32> to vector<1x32xf32>
    %49 = vector.broadcast %48 : vector<1x32xf32> to vector<8x32xf32>
    %50 = arith.mulf %47, %49 : vector<8x32xf32>
    %cst_31 = arith.constant dense<0.000000e+00> : vector<8xf32>
    %51 = vector.multi_reduction <add>, %50, %cst_31 [1] : vector<8x32xf32> to vector<8xf32>
    %52 = vector.shape_cast %51 : vector<8xf32> to vector<8x1xf32>
    %53 = vector.extract_strided_slice %41 {offsets = [2, 0], sizes = [1, 1], strides = [1, 1]} : vector<8x32xf32> to vector<1x1xf32>
    %54 = vector.broadcast %53 : vector<1x1xf32> to vector<8x1xf32>
    %55 = arith.addf %52, %54 : vector<8x1xf32>
    %c0_32 = arith.constant 0 : index
    %c0_33 = arith.constant 0 : index
    %56 = vector.load %arg4[%c0_32, %c0_33] : memref<8x1xf32, #tpu.memory_space<vmem>>, vector<8x1xf32>
    tpu.vector_store %arg4[%c0_32, %c0_33], %55 {strides = array<i32>} : memref<8x1xf32, #tpu.memory_space<vmem>>, vector<8x1xf32>,
    return
  }
}

</mosaic_0001>

<llo_original>
// kernel: sage_forward.1
$region0: #{sage_forward.1}
  #allocation0 [shape = 'u32[]', space=smem, size = 0x4, offset = 0x4, fixed_abs, tag = 'smem constant byte address 0x4 - core index']
  #allocation1 [shape = 'u32[144,128]{1,0:T(1,128)}', space=vmem, size = 0x12000, scoped, tag = 'internal scratch']
  %s0 = inlined_call_operand.vmem [shape: f32[32,16], index: 0, kind: input, shape index: {}]
  %s1 = inlined_call_operand.vmem [shape: s32[16,1], index: 1, kind: input, shape index: {}]
  %s2 = inlined_call_operand.vmem [shape: f32[3,64,32], index: 2, kind: input, shape index: {}]
  %s3 = inlined_call_operand.vmem [shape: f32[48,32], index: 3, kind: input, shape index: {}]
  %s4 = inlined_call_operand.vmem [shape: f32[8,1], index: 4, kind: output, shape index: {}]
  %s5 = sld [smem:[#allocation0]]
  $region26: #{sage_forward.1} parent=0
    _
  %s7 = ssub.s32 1, %s5
  %s8 = scalar_select 0, %s7, %s5
  // Predicated region
  $region2: #{sage_forward.1} parent=0 // pred_check
    _
  $region3: #{sage_forward.1} parent=0 // pred_check_branch
    %10 = sbr.rel (0) target = $region5
  $region4: #{sage_forward.1} parent=0 // pred_region
    _
  $region5: #{sage_forward.1} parent=0 // pred_fallthru
    _
  // Predicated region
  $region6: #{sage_forward.1} parent=0 // pred_check
    _
  $region7: #{sage_forward.1} parent=0 // pred_check_branch
    %12 = sbr.rel (0) target = $region9
  $region8: #{sage_forward.1} parent=0 // pred_region
    _
  $region9: #{sage_forward.1} parent=0 // pred_fallthru
    _
  // Predicated region
  $region10: #{sage_forward.1} parent=0 // pred_check
    _
  $region11: #{sage_forward.1} parent=0 // pred_check_branch
    %14 = sbr.rel (0) target = $region13
  $region12: #{sage_forward.1} parent=0 // pred_region
    _
  $region13: #{sage_forward.1} parent=0 // pred_fallthru
    _
  // Predicated region
  $region14: #{sage_forward.1} parent=0 // pred_check
    _
  $region15: #{sage_forward.1} parent=0 // pred_check_branch
    %16 = sbr.rel (0) target = $region17
  $region16: #{sage_forward.1} parent=0 // pred_region
    _
  $region17: #{sage_forward.1} parent=0 // pred_fallthru
    _
  %v17 = vld [vmem:[%s0] sm:$0xff]
  %v18 = vld [vmem:[%s0 + $0x8] sm:$0xff]
  %v19 = vld [vmem:[%s0 + $0x10] sm:$0xff]
  %v20 = vld [vmem:[%s0 + $0x18] sm:$0xff]
  %v21 = vld [vmem:[%s1] sm:$0xff]
  %v22 = vld [vmem:[%s1 + $0x8] sm:$0xff]
  %v23 = vlaneseq
  %v24 = vand.u32 %v23, 127
  %25 = vset.pattern.permute.xlu0 0
  %26 = vperm.xlu0 %25, %v21
  %v27 = vpop.permute.xlu0 %26
  %28 = vset.pattern.permute.xlu0 0
  %29 = vperm.xlu0 %28, %v22
  %v30 = vpop.permute.xlu0 %29
  %vm31 = vcmp.eq.s32.totalorder %v24, %v27
  %vm32 = vcmp.eq.s32.totalorder %v24, %v30
  %v33 = vsel %vm31, 1, 0
  %v34 = vsel %vm32, 1, 0
  %v35 = vcvt.s32.f32 %v33
  %v36 = vcvt.s32.f32 %v34
  %vm37 = vcmask 130048
  %v39 = vsel %vm37, %v17, 0
  %v42 = vsel %vm37, %v18, 0
  %44 = vmatprep.subr.mxu0 0.0
  %45 = vmatpush1.msra.mxu0 0.0
  %46 = vmatprep.subr.mxu0 0.0
  %47 = vmatpush1.msra.mxu0 0.0
  %48 = vmatprep.subr.mxu0 0.0
  %49 = vmatpush1.msra.mxu0 0.0
  %50 = vmatprep.subr.mxu0 0.0
  %51 = vmatpush1.msra.mxu0 0.0
  %52 = vmatprep.subr.mxu0 0.0
  %53 = vmatpush1.msra.mxu0 0.0
  %54 = vmatprep.subr.mxu0 0.0
  %55 = vmatpush1.msra.mxu0 0.0
  %56 = vmatprep.subr.mxu0 0.0
  %57 = vmatpush1.msra.mxu0 0.0
  %58 = vmatprep.subr.mxu0 0.0
  %59 = vmatpush1.msra.mxu0 0.0
  %60 = vmatprep.subr.mxu0 0.0
  %61 = vmatpush1.msra.mxu0 0.0
  %62 = vmatprep.subr.mxu0 0.0
  %63 = vmatpush1.msra.mxu0 0.0
  %64 = vmatprep.subr.mxu0 0.0
  %65 = vmatpush1.msra.mxu0 0.0
  %66 = vmatprep.subr.mxu0 0.0
  %67 = vmatpush1.msra.mxu0 0.0
  %68 = vmatprep.subr.mxu0 0.0
  %69 = vmatpush1.msra.mxu0 0.0
  %70 = vmatprep.subr.mxu0 0.0
  %71 = vmatpush1.msra.mxu0 0.0
  %72 = vmatprep.subr.mxu0 0.0
  %73 = vmatpush1.msra.mxu0 %v36
  %74 = vmatprep.subr.mxu0 0.0
  %75 = vmatpush1.msra.mxu0 %v35
  %76 = vmatprep.subr.mxu0 0.0
  %77 = vmatpush2.msra.mxu0 0.0
  %78 = vmatprep.subr.mxu0 0.0
  %79 = vmatpush2.msra.mxu0 0.0
  %80 = vmatprep.subr.mxu0 0.0
  %81 = vmatpush2.msra.mxu0 0.0
  %82 = vmatprep.subr.mxu0 0.0
  %83 = vmatpush2.msra.mxu0 0.0
  %84 = vmatprep.subr.mxu0 0.0
  %85 = vmatpush2.msra.mxu0 0.0
  %86 = vmatprep.subr.mxu0 0.0
  %87 = vmatpush2.msra.mxu0 0.0
  %88 = vmatprep.subr.mxu0 0.0
  %89 = vmatpush2.msra.mxu0 0.0
  %90 = vmatprep.subr.mxu0 0.0
  %91 = vmatpush2.msra.mxu0 0.0
  %92 = vmatprep.subr.mxu0 0.0
  %93 = vmatpush2.msra.mxu0 0.0
  %94 = vmatprep.subr.mxu0 0.0
  %95 = vmatpush2.msra.mxu0 0.0
  %96 = vmatprep.subr.mxu0 0.0
  %97 = vmatpush2.msra.mxu0 0.0
  %98 = vmatprep.subr.mxu0 0.0
  %99 = vmatpush2.msra.mxu0 0.0
  %100 = vmatprep.subr.mxu0 0.0
  %101 = vmatpush2.msra.mxu0 0.0
  %102 = vmatprep.subr.mxu0 0.0
  %103 = vmatpush2.msra.mxu0 0.0
  %104 = vmatprep.subr.mxu0 0.0
  %105 = vmatpush2.msra.mxu0 0.0
  %106 = vmatprep.subr.mxu0 0.0
  %107 = vmatpush2.msra.mxu0 0.0
  %108 = vmatprep.mubr.f32.mxu0 0.0
  %109 = vmatmul.mubr.f32.gmra.mxu0 %v39
  %v110 = vpop.f32.mrf.mxu0
  %v111 = vadd.f32 0.0, %v110
  %v112 = vpop.f32.mrf.mxu0
  %113 = vmatprep.mubr.f32.mxu0 0.0
  %114 = vmatmul.mubr.f32.gmra.mxu0 %v42
  %v115 = vpop.f32.mrf.mxu0
  %v116 = vadd.f32 0.0, %v115
  %v117 = vpop.f32.mrf.mxu0
  %118 = vdwg.mxu0
  %121 = vrot.lane.b32.xlu0 %v35, 32
  %v122 = vpop.permute.xlu0 %121
  %123 = vrot.lane.b32.xlu0 %v36, 32
  %v124 = vpop.permute.xlu0 %123
  %vm127 = vcmask 261120
  %v128 = vsel %vm127, %v111, %v122
  %v129 = vsel %vm127, %v116, %v124
  %v130 = vld [vmem:[%s2] sm:$0xff]
  %v131 = vld [vmem:[%s2 + $0x8] sm:$0xff]
  %v132 = vld [vmem:[%s2 + $0x10] sm:$0xff]
  %v133 = vld [vmem:[%s2 + $0x18] sm:$0xff]
  %v134 = vld [vmem:[%s2 + $0x20] sm:$0xff]
  %v135 = vld [vmem:[%s2 + $0x28] sm:$0xff]
  %v136 = vld [vmem:[%s2 + $0x30] sm:$0xff]
  %v137 = vld [vmem:[%s2 + $0x38] sm:$0xff]
  %v138 = vld [vmem:[%s3] sm:$0x1]
  %v139 = vlaneseq
  %v140 = vshrl.u32 %v139, 7
  %v141 = vsub.s32 0, %v140
  %v142 = vrot.slane %v138, %v141
  %vm143 = vcmask 523264
  %v145 = vsel %vm143, %v128, 0
  %v148 = vsel %vm143, %v129, 0
  %150 = vmatprep.subr.mxu0 0.0
  %151 = vmatpush1.msra.mxu0 0.0
  %152 = vmatprep.subr.mxu0 0.0
  %153 = vmatpush1.msra.mxu0 0.0
  %154 = vmatprep.subr.mxu0 0.0
  %155 = vmatpush1.msra.mxu0 0.0
  %156 = vmatprep.subr.mxu0 0.0
  %157 = vmatpush1.msra.mxu0 0.0
  %158 = vmatprep.subr.mxu0 0.0
  %159 = vmatpush1.msra.mxu0 0.0
  %160 = vmatprep.subr.mxu0 0.0
  %161 = vmatpush1.msra.mxu0 0.0
  %162 = vmatprep.subr.mxu0 0.0
  %163 = vmatpush1.msra.mxu0 0.0
  %164 = vmatprep.subr.mxu0 0.0
  %165 = vmatpush1.msra.mxu0 0.0
  %166 = vmatprep.subr.mxu0 0.0
  %167 = vmatpush1.msra.mxu0 %v137
  %168 = vmatprep.subr.mxu0 0.0
  %169 = vmatpush1.msra.mxu0 %v136
  %170 = vmatprep.subr.mxu0 0.0
  %171 = vmatpush1.msra.mxu0 %v135
  %172 = vmatprep.subr.mxu0 0.0
  %173 = vmatpush1.msra.mxu0 %v134
  %174 = vmatprep.subr.mxu0 0.0
  %175 = vmatpush1.msra.mxu0 %v133
  %176 = vmatprep.subr.mxu0 0.0
  %177 = vmatpush1.msra.mxu0 %v132
  %178 = vmatprep.subr.mxu0 0.0
  %179 = vmatpush1.msra.mxu0 %v131
  %180 = vmatprep.subr.mxu0 0.0
  %181 = vmatpush1.msra.mxu0 %v130
  %182 = vmatprep.subr.mxu0 0.0
  %183 = vmatpush2.msra.mxu0 0.0
  %184 = vmatprep.subr.mxu0 0.0
  %185 = vmatpush2.msra.mxu0 0.0
  %186 = vmatprep.subr.mxu0 0.0
  %187 = vmatpush2.msra.mxu0 0.0
  %188 = vmatprep.subr.mxu0 0.0
  %189 = vmatpush2.msra.mxu0 0.0
  %190 = vmatprep.subr.mxu0 0.0
  %191 = vmatpush2.msra.mxu0 0.0
  %192 = vmatprep.subr.mxu0 0.0
  %193 = vmatpush2.msra.mxu0 0.0
  %194 = vmatprep.subr.mxu0 0.0
  %195 = vmatpush2.msra.mxu0 0.0
  %196 = vmatprep.subr.mxu0 0.0
  %197 = vmatpush2.msra.mxu0 0.0
  %198 = vmatprep.subr.mxu0 0.0
  %199 = vmatpush2.msra.mxu0 0.0
  %200 = vmatprep.subr.mxu0 0.0
  %201 = vmatpush2.msra.mxu0 0.0
  %202 = vmatprep.subr.mxu0 0.0
  %203 = vmatpush2.msra.mxu0 0.0
  %204 = vmatprep.subr.mxu0 0.0
  %205 = vmatpush2.msra.mxu0 0.0
  %206 = vmatprep.subr.mxu0 0.0
  %207 = vmatpush2.msra.mxu0 0.0
  %208 = vmatprep.subr.mxu0 0.0
  %209 = vmatpush2.msra.mxu0 0.0
  %210 = vmatprep.subr.mxu0 0.0
  %211 = vmatpush2.msra.mxu0 0.0
  %212 = vmatprep.subr.mxu0 0.0
  %213 = vmatpush2.msra.mxu0 0.0
  %214 = vmatprep.mubr.f32.mxu0 0.0
  %215 = vmatmul.mubr.f32.gmra.mxu0 %v145
  %v216 = vpop.f32.mrf.mxu0
  %v217 = vadd.f32 %v142, %v216
  %v218 = vpop.f32.mrf.mxu0
  %219 = vmatprep.mubr.f32.mxu0 0.0
  %220 = vmatmul.mubr.f32.gmra.mxu0 %v148
  %v221 = vpop.f32.mrf.mxu0
  %v222 = vadd.f32 %v142, %v221
  %v223 = vpop.f32.mrf.mxu0
  %224 = vdwg.mxu0
  %v225 = vmax.f32 %v217, 0.0
  %v226 = vmax.f32 %v222, 0.0
  %227 = vmatprep.subr.mxu0 0.0
  %228 = vmatpush1.msra.mxu0 0.0
  %229 = vmatprep.subr.mxu0 0.0
  %230 = vmatpush1.msra.mxu0 0.0
  %231 = vmatprep.subr.mxu0 0.0
  %232 = vmatpush1.msra.mxu0 0.0
  %233 = vmatprep.subr.mxu0 0.0
  %234 = vmatpush1.msra.mxu0 0.0
  %235 = vmatprep.subr.mxu0 0.0
  %236 = vmatpush1.msra.mxu0 0.0
  %237 = vmatprep.subr.mxu0 0.0
  %238 = vmatpush1.msra.mxu0 0.0
  %239 = vmatprep.subr.mxu0 0.0
  %240 = vmatpush1.msra.mxu0 0.0
  %241 = vmatprep.subr.mxu0 0.0
  %242 = vmatpush1.msra.mxu0 0.0
  %243 = vmatprep.subr.mxu0 0.0
  %244 = vmatpush1.msra.mxu0 0.0
  %245 = vmatprep.subr.mxu0 0.0
  %246 = vmatpush1.msra.mxu0 0.0
  %247 = vmatprep.subr.mxu0 0.0
  %248 = vmatpush1.msra.mxu0 0.0
  %249 = vmatprep.subr.mxu0 0.0
  %250 = vmatpush1.msra.mxu0 0.0
  %251 = vmatprep.subr.mxu0 0.0
  %252 = vmatpush1.msra.mxu0 0.0
  %253 = vmatprep.subr.mxu0 0.0
  %254 = vmatpush1.msra.mxu0 0.0
  %255 = vmatprep.subr.mxu0 0.0
  %256 = vmatpush1.msra.mxu0 %v226
  %257 = vmatprep.subr.mxu0 0.0
  %258 = vmatpush1.msra.mxu0 %v225
  %259 = vmatprep.subr.mxu0 0.0
  %260 = vmatpush2.msra.mxu0 0.0
  %261 = vmatprep.subr.mxu0 0.0
  %262 = vmatpush2.msra.mxu0 0.0
  %263 = vmatprep.subr.mxu0 0.0
  %264 = vmatpush2.msra.mxu0 0.0
  %265 = vmatprep.subr.mxu0 0.0
  %266 = vmatpush2.msra.mxu0 0.0
  %267 = vmatprep.subr.mxu0 0.0
  %268 = vmatpush2.msra.mxu0 0.0
  %269 = vmatprep.subr.mxu0 0.0
  %270 = vmatpush2.msra.mxu0 0.0
  %271 = vmatprep.subr.mxu0 0.0
  %272 = vmatpush2.msra.mxu0 0.0
  %273 = vmatprep.subr.mxu0 0.0
  %274 = vmatpush2.msra.mxu0 0.0
  %275 = vmatprep.subr.mxu0 0.0
  %276 = vmatpush2.msra.mxu0 0.0
  %277 = vmatprep.subr.mxu0 0.0
  %278 = vmatpush2.msra.mxu0 0.0
  %279 = vmatprep.subr.mxu0 0.0
  %280 = vmatpush2.msra.mxu0 0.0
  %281 = vmatprep.subr.mxu0 0.0
  %282 = vmatpush2.msra.mxu0 0.0
  %283 = vmatprep.subr.mxu0 0.0
  %284 = vmatpush2.msra.mxu0 0.0
  %285 = vmatprep.subr.mxu0 0.0
  %286 = vmatpush2.msra.mxu0 0.0
  %287 = vmatprep.subr.mxu0 0.0
  %288 = vmatpush2.msra.mxu0 0.0
  %289 = vmatprep.subr.mxu0 0.0
  %290 = vmatpush2.msra.mxu0 0.0
  %291 = vmatprep.mubr.f32.mxu0 0.0
  %292 = vmatmul.mubr.f32.gmra.mxu0 %v39
  %v293 = vpop.f32.mrf.mxu0
  %v294 = vadd.f32 0.0, %v293
  %v295 = vpop.f32.mrf.mxu0
  %296 = vmatprep.mubr.f32.mxu0 0.0
  %297 = vmatmul.mubr.f32.gmra.mxu0 %v42
  %v298 = vpop.f32.mrf.mxu0
  %v299 = vadd.f32 0.0, %v298
  %v300 = vpop.f32.mrf.mxu0
  %301 = vdwg.mxu0
  %304 = vrot.lane.b32.xlu0 %v225, 32
  %v305 = vpop.permute.xlu0 %304
  %306 = vrot.lane.b32.xlu0 %v226, 32
  %v307 = vpop.permute.xlu0 %306
  %v310 = vsel %vm127, %v294, %v305
  %v311 = vsel %vm127, %v299, %v307
  %s312 = scalar_lea.vmem %s2, 64
  %v313 = vld [vmem:[%s312] sm:$0xff]
  %v314 = vld [vmem:[%s312 + $0x8] sm:$0xff]
  %v315 = vld [vmem:[%s312 + $0x10] sm:$0xff]
  %v316 = vld [vmem:[%s312 + $0x18] sm:$0xff]
  %v317 = vld [vmem:[%s312 + $0x20] sm:$0xff]
  %v318 = vld [vmem:[%s312 + $0x28] sm:$0xff]
  %v319 = vld [vmem:[%s312 + $0x30] sm:$0xff]
  %v320 = vld [vmem:[%s312 + $0x38] sm:$0xff]
  %v321 = vld [vmem:[%s3 + $0x1] sm:$0x1]
  %v322 = vlaneseq
  %v323 = vshrl.u32 %v322, 7
  %v324 = vsub.s32 0, %v323
  %v325 = vrot.slane %v321, %v324
  %v327 = vsel %vm143, %v310, 0
  %v330 = vsel %vm143, %v311, 0
  %332 = vmatprep.subr.mxu0 0.0
  %333 = vmatpush1.msra.mxu0 0.0
  %334 = vmatprep.subr.mxu0 0.0
  %335 = vmatpush1.msra.mxu0 0.0
  %336 = vmatprep.subr.mxu0 0.0
  %337 = vmatpush1.msra.mxu0 0.0
  %338 = vmatprep.subr.mxu0 0.0
  %339 = vmatpush1.msra.mxu0 0.0
  %340 = vmatprep.subr.mxu0 0.0
  %341 = vmatpush1.msra.mxu0 0.0
  %342 = vmatprep.subr.mxu0 0.0
  %343 = vmatpush1.msra.mxu0 0.0
  %344 = vmatprep.subr.mxu0 0.0
  %345 = vmatpush1.msra.mxu0 0.0
  %346 = vmatprep.subr.mxu0 0.0
  %347 = vmatpush1.msra.mxu0 0.0
  %348 = vmatprep.subr.mxu0 0.0
  %349 = vmatpush1.msra.mxu0 %v320
  %350 = vmatprep.subr.mxu0 0.0
  %351 = vmatpush1.msra.mxu0 %v319
  %352 = vmatprep.subr.mxu0 0.0
  %353 = vmatpush1.msra.mxu0 %v318
  %354 = vmatprep.subr.mxu0 0.0
  %355 = vmatpush1.msra.mxu0 %v317
  %356 = vmatprep.subr.mxu0 0.0
  %357 = vmatpush1.msra.mxu0 %v316
  %358 = vmatprep.subr.mxu0 0.0
  %359 = vmatpush1.msra.mxu0 %v315
  %360 = vmatprep.subr.mxu0 0.0
  %361 = vmatpush1.msra.mxu0 %v314
  %362 = vmatprep.subr.mxu0 0.0
  %363 = vmatpush1.msra.mxu0 %v313
  %364 = vmatprep.subr.mxu0 0.0
  %365 = vmatpush2.msra.mxu0 0.0
  %366 = vmatprep.subr.mxu0 0.0
  %367 = vmatpush2.msra.mxu0 0.0
  %368 = vmatprep.subr.mxu0 0.0
  %369 = vmatpush2.msra.mxu0 0.0
  %370 = vmatprep.subr.mxu0 0.0
  %371 = vmatpush2.msra.mxu0 0.0
  %372 = vmatprep.subr.mxu0 0.0
  %373 = vmatpush2.msra.mxu0 0.0
  %374 = vmatprep.subr.mxu0 0.0
  %375 = vmatpush2.msra.mxu0 0.0
  %376 = vmatprep.subr.mxu0 0.0
  %377 = vmatpush2.msra.mxu0 0.0
  %378 = vmatprep.subr.mxu0 0.0
  %379 = vmatpush2.msra.mxu0 0.0
  %380 = vmatprep.subr.mxu0 0.0
  %381 = vmatpush2.msra.mxu0 0.0
  %382 = vmatprep.subr.mxu0 0.0
  %383 = vmatpush2.msra.mxu0 0.0
  %384 = vmatprep.subr.mxu0 0.0
  %385 = vmatpush2.msra.mxu0 0.0
  %386 = vmatprep.subr.mxu0 0.0
  %387 = vmatpush2.msra.mxu0 0.0
  %388 = vmatprep.subr.mxu0 0.0
  %389 = vmatpush2.msra.mxu0 0.0
  %390 = vmatprep.subr.mxu0 0.0
  %391 = vmatpush2.msra.mxu0 0.0
  %392 = vmatprep.subr.mxu0 0.0
  %393 = vmatpush2.msra.mxu0 0.0
  %394 = vmatprep.subr.mxu0 0.0
  %395 = vmatpush2.msra.mxu0 0.0
  %396 = vmatprep.mubr.f32.mxu0 0.0
  %397 = vmatmul.mubr.f32.gmra.mxu0 %v327
  %v398 = vpop.f32.mrf.mxu0
  %v399 = vadd.f32 %v325, %v398
  %v400 = vpop.f32.mrf.mxu0
  %401 = vmatprep.mubr.f32.mxu0 0.0
  %402 = vmatmul.mubr.f32.gmra.mxu0 %v330
  %v403 = vpop.f32.mrf.mxu0
  %v404 = vadd.f32 %v325, %v403
  %v405 = vpop.f32.mrf.mxu0
  %406 = vdwg.mxu0
  %v407 = vmax.f32 %v399, 0.0
  %v408 = vmax.f32 %v404, 0.0
  %409 = vmatprep.subr.mxu0 0.0
  %410 = vmatpush1.msra.mxu0 0.0
  %411 = vmatprep.subr.mxu0 0.0
  %412 = vmatpush1.msra.mxu0 0.0
  %413 = vmatprep.subr.mxu0 0.0
  %414 = vmatpush1.msra.mxu0 0.0
  %415 = vmatprep.subr.mxu0 0.0
  %416 = vmatpush1.msra.mxu0 0.0
  %417 = vmatprep.subr.mxu0 0.0
  %418 = vmatpush1.msra.mxu0 0.0
  %419 = vmatprep.subr.mxu0 0.0
  %420 = vmatpush1.msra.mxu0 0.0
  %421 = vmatprep.subr.mxu0 0.0
  %422 = vmatpush1.msra.mxu0 0.0
  %423 = vmatprep.subr.mxu0 0.0
  %424 = vmatpush1.msra.mxu0 0.0
  %425 = vmatprep.subr.mxu0 0.0
  %426 = vmatpush1.msra.mxu0 0.0
  %427 = vmatprep.subr.mxu0 0.0
  %428 = vmatpush1.msra.mxu0 0.0
  %429 = vmatprep.subr.mxu0 0.0
  %430 = vmatpush1.msra.mxu0 0.0
  %431 = vmatprep.subr.mxu0 0.0
  %432 = vmatpush1.msra.mxu0 0.0
  %433 = vmatprep.subr.mxu0 0.0
  %434 = vmatpush1.msra.mxu0 0.0
  %435 = vmatprep.subr.mxu0 0.0
  %436 = vmatpush1.msra.mxu0 0.0
  %437 = vmatprep.subr.mxu0 0.0
  %438 = vmatpush1.msra.mxu0 %v408
  %439 = vmatprep.subr.mxu0 0.0
  %440 = vmatpush1.msra.mxu0 %v407
  %441 = vmatprep.subr.mxu0 0.0
  %442 = vmatpush2.msra.mxu0 0.0
  %443 = vmatprep.subr.mxu0 0.0
  %444 = vmatpush2.msra.mxu0 0.0
  %445 = vmatprep.subr.mxu0 0.0
  %446 = vmatpush2.msra.mxu0 0.0
  %447 = vmatprep.subr.mxu0 0.0
  %448 = vmatpush2.msra.mxu0 0.0
  %449 = vmatprep.subr.mxu0 0.0
  %450 = vmatpush2.msra.mxu0 0.0
  %451 = vmatprep.subr.mxu0 0.0
  %452 = vmatpush2.msra.mxu0 0.0
  %453 = vmatprep.subr.mxu0 0.0
  %454 = vmatpush2.msra.mxu0 0.0
  %455 = vmatprep.subr.mxu0 0.0
  %456 = vmatpush2.msra.mxu0 0.0
  %457 = vmatprep.subr.mxu0 0.0
  %458 = vmatpush2.msra.mxu0 0.0
  %459 = vmatprep.subr.mxu0 0.0
  %460 = vmatpush2.msra.mxu0 0.0
  %461 = vmatprep.subr.mxu0 0.0
  %462 = vmatpush2.msra.mxu0 0.0
  %463 = vmatprep.subr.mxu0 0.0
  %464 = vmatpush2.msra.mxu0 0.0
  %465 = vmatprep.subr.mxu0 0.0
  %466 = vmatpush2.msra.mxu0 0.0
  %467 = vmatprep.subr.mxu0 0.0
  %468 = vmatpush2.msra.mxu0 0.0
  %469 = vmatprep.subr.mxu0 0.0
  %470 = vmatpush2.msra.mxu0 0.0
  %471 = vmatprep.subr.mxu0 0.0
  %472 = vmatpush2.msra.mxu0 0.0
  %473 = vmatprep.mubr.f32.mxu0 0.0
  %474 = vmatmul.mubr.f32.gmra.mxu0 %v39
  %v475 = vpop.f32.mrf.mxu0
  %v476 = vadd.f32 0.0, %v475
  %v477 = vpop.f32.mrf.mxu0
  %478 = vmatprep.mubr.f32.mxu0 0.0
  %479 = vmatmul.mubr.f32.gmra.mxu0 %v42
  %v480 = vpop.f32.mrf.mxu0
  %v481 = vadd.f32 0.0, %v480
  %v482 = vpop.f32.mrf.mxu0
  %483 = vdwg.mxu0
  %486 = vrot.lane.b32.xlu0 %v407, 32
  %v487 = vpop.permute.xlu0 %486
  %488 = vrot.lane.b32.xlu0 %v408, 32
  %v489 = vpop.permute.xlu0 %488
  %v492 = vsel %vm127, %v476, %v487
  %v493 = vsel %vm127, %v481, %v489
  %s494 = scalar_lea.vmem %s2, 128
  %v495 = vld [vmem:[%s494] sm:$0xff]
  %v496 = vld [vmem:[%s494 + $0x8] sm:$0xff]
  %v497 = vld [vmem:[%s494 + $0x10] sm:$0xff]
  %v498 = vld [vmem:[%s494 + $0x18] sm:$0xff]
  %v499 = vld [vmem:[%s494 + $0x20] sm:$0xff]
  %v500 = vld [vmem:[%s494 + $0x28] sm:$0xff]
  %v501 = vld [vmem:[%s494 + $0x30] sm:$0xff]
  %v502 = vld [vmem:[%s494 + $0x38] sm:$0xff]
  %v503 = vld [vmem:[%s3 + $0x2] sm:$0x1]
  %v504 = vlaneseq
  %v505 = vshrl.u32 %v504, 7
  %v506 = vsub.s32 0, %v505
  %v507 = vrot.slane %v503, %v506
  %v509 = vsel %vm143, %v492, 0
  %v512 = vsel %vm143, %v493, 0
  %514 = vmatprep.subr.mxu0 0.0
  %515 = vmatpush1.msra.mxu0 0.0
  %516 = vmatprep.subr.mxu0 0.0
  %517 = vmatpush1.msra.mxu0 0.0
  %518 = vmatprep.subr.mxu0 0.0
  %519 = vmatpush1.msra.mxu0 0.0
  %520 = vmatprep.subr.mxu0 0.0
  %521 = vmatpush1.msra.mxu0 0.0
  %522 = vmatprep.subr.mxu0 0.0
  %523 = vmatpush1.msra.mxu0 0.0
  %524 = vmatprep.subr.mxu0 0.0
  %525 = vmatpush1.msra.mxu0 0.0
  %526 = vmatprep.subr.mxu0 0.0
  %527 = vmatpush1.msra.mxu0 0.0
  %528 = vmatprep.subr.mxu0 0.0
  %529 = vmatpush1.msra.mxu0 0.0
  %530 = vmatprep.subr.mxu0 0.0
  %531 = vmatpush1.msra.mxu0 %v502
  %532 = vmatprep.subr.mxu0 0.0
  %533 = vmatpush1.msra.mxu0 %v501
  %534 = vmatprep.subr.mxu0 0.0
  %535 = vmatpush1.msra.mxu0 %v500
  %536 = vmatprep.subr.mxu0 0.0
  %537 = vmatpush1.msra.mxu0 %v499
  %538 = vmatprep.subr.mxu0 0.0
  %539 = vmatpush1.msra.mxu0 %v498
  %540 = vmatprep.subr.mxu0 0.0
  %541 = vmatpush1.msra.mxu0 %v497
  %542 = vmatprep.subr.mxu0 0.0
  %543 = vmatpush1.msra.mxu0 %v496
  %544 = vmatprep.subr.mxu0 0.0
  %545 = vmatpush1.msra.mxu0 %v495
  %546 = vmatprep.subr.mxu0 0.0
  %547 = vmatpush2.msra.mxu0 0.0
  %548 = vmatprep.subr.mxu0 0.0
  %549 = vmatpush2.msra.mxu0 0.0
  %550 = vmatprep.subr.mxu0 0.0
  %551 = vmatpush2.msra.mxu0 0.0
  %552 = vmatprep.subr.mxu0 0.0
  %553 = vmatpush2.msra.mxu0 0.0
  %554 = vmatprep.subr.mxu0 0.0
  %555 = vmatpush2.msra.mxu0 0.0
  %556 = vmatprep.subr.mxu0 0.0
  %557 = vmatpush2.msra.mxu0 0.0
  %558 = vmatprep.subr.mxu0 0.0
  %559 = vmatpush2.msra.mxu0 0.0
  %560 = vmatprep.subr.mxu0 0.0
  %561 = vmatpush2.msra.mxu0 0.0
  %562 = vmatprep.subr.mxu0 0.0
  %563 = vmatpush2.msra.mxu0 0.0
  %564 = vmatprep.subr.mxu0 0.0
  %565 = vmatpush2.msra.mxu0 0.0
  %566 = vmatprep.subr.mxu0 0.0
  %567 = vmatpush2.msra.mxu0 0.0
  %568 = vmatprep.subr.mxu0 0.0
  %569 = vmatpush2.msra.mxu0 0.0
  %570 = vmatprep.subr.mxu0 0.0
  %571 = vmatpush2.msra.mxu0 0.0
  %572 = vmatprep.subr.mxu0 0.0
  %573 = vmatpush2.msra.mxu0 0.0
  %574 = vmatprep.subr.mxu0 0.0
  %575 = vmatpush2.msra.mxu0 0.0
  %576 = vmatprep.subr.mxu0 0.0
  %577 = vmatpush2.msra.mxu0 0.0
  %578 = vmatprep.mubr.f32.mxu0 0.0
  %579 = vmatmul.mubr.f32.gmra.mxu0 %v509
  %v580 = vpop.f32.mrf.mxu0
  %v581 = vadd.f32 %v507, %v580
  %v582 = vpop.f32.mrf.mxu0
  %583 = vmatprep.mubr.f32.mxu0 0.0
  %584 = vmatmul.mubr.f32.gmra.mxu0 %v512
  %v585 = vpop.f32.mrf.mxu0
  %v586 = vadd.f32 %v507, %v585
  %v587 = vpop.f32.mrf.mxu0
  %588 = vdwg.mxu0
  %v590 = vsel %vm37, %v19, 0
  %592 = vmatprep.subr.mxu0 0.0
  %593 = vmatpush1.msra.mxu0 0.0
  %594 = vmatprep.subr.mxu0 0.0
  %595 = vmatpush1.msra.mxu0 0.0
  %596 = vmatprep.subr.mxu0 0.0
  %597 = vmatpush1.msra.mxu0 0.0
  %598 = vmatprep.subr.mxu0 0.0
  %599 = vmatpush1.msra.mxu0 0.0
  %600 = vmatprep.subr.mxu0 0.0
  %601 = vmatpush1.msra.mxu0 0.0
  %602 = vmatprep.subr.mxu0 0.0
  %603 = vmatpush1.msra.mxu0 0.0
  %604 = vmatprep.subr.mxu0 0.0
  %605 = vmatpush1.msra.mxu0 0.0
  %606 = vmatprep.subr.mxu0 0.0
  %607 = vmatpush1.msra.mxu0 0.0
  %608 = vmatprep.subr.mxu0 0.0
  %609 = vmatpush1.msra.mxu0 0.0
  %610 = vmatprep.subr.mxu0 0.0
  %611 = vmatpush1.msra.mxu0 0.0
  %612 = vmatprep.subr.mxu0 0.0
  %613 = vmatpush1.msra.mxu0 0.0
  %614 = vmatprep.subr.mxu0 0.0
  %615 = vmatpush1.msra.mxu0 0.0
  %616 = vmatprep.subr.mxu0 0.0
  %617 = vmatpush1.msra.mxu0 0.0
  %618 = vmatprep.subr.mxu0 0.0
  %619 = vmatpush1.msra.mxu0 0.0
  %620 = vmatprep.subr.mxu0 0.0
  %621 = vmatpush1.msra.mxu0 %v586
  %622 = vmatprep.subr.mxu0 0.0
  %623 = vmatpush1.msra.mxu0 %v581
  %624 = vmatprep.subr.mxu0 0.0
  %625 = vmatpush2.msra.mxu0 0.0
  %626 = vmatprep.subr.mxu0 0.0
  %627 = vmatpush2.msra.mxu0 0.0
  %628 = vmatprep.subr.mxu0 0.0
  %629 = vmatpush2.msra.mxu0 0.0
  %630 = vmatprep.subr.mxu0 0.0
  %631 = vmatpush2.msra.mxu0 0.0
  %632 = vmatprep.subr.mxu0 0.0
  %633 = vmatpush2.msra.mxu0 0.0
  %634 = vmatprep.subr.mxu0 0.0
  %635 = vmatpush2.msra.mxu0 0.0
  %636 = vmatprep.subr.mxu0 0.0
  %637 = vmatpush2.msra.mxu0 0.0
  %638 = vmatprep.subr.mxu0 0.0
  %639 = vmatpush2.msra.mxu0 0.0
  %640 = vmatprep.subr.mxu0 0.0
  %641 = vmatpush2.msra.mxu0 0.0
  %642 = vmatprep.subr.mxu0 0.0
  %643 = vmatpush2.msra.mxu0 0.0
  %644 = vmatprep.subr.mxu0 0.0
  %645 = vmatpush2.msra.mxu0 0.0
  %646 = vmatprep.subr.mxu0 0.0
  %647 = vmatpush2.msra.mxu0 0.0
  %648 = vmatprep.subr.mxu0 0.0
  %649 = vmatpush2.msra.mxu0 0.0
  %650 = vmatprep.subr.mxu0 0.0
  %651 = vmatpush2.msra.mxu0 0.0
  %652 = vmatprep.subr.mxu0 0.0
  %653 = vmatpush2.msra.mxu0 0.0
  %654 = vmatprep.subr.mxu0 0.0
  %655 = vmatpush2.msra.mxu0 0.0
  %656 = vmatprep.mubr.f32.mxu0 0.0
  %657 = vmatmul.mubr.f32.gmra.mxu0 %v590
  %v658 = vpop.f32.mrf.mxu0
  %v659 = vadd.f32 0.0, %v658
  %v660 = vpop.f32.mrf.mxu0
  %661 = vdwg.mxu0
  %v663 = vsel %vm37, %v20, 0
  %665 = vmatprep.subr.mxu0 0.0
  %666 = vmatpush1.msra.mxu0 0.0
  %667 = vmatprep.subr.mxu0 0.0
  %668 = vmatpush1.msra.mxu0 0.0
  %669 = vmatprep.subr.mxu0 0.0
  %670 = vmatpush1.msra.mxu0 0.0
  %671 = vmatprep.subr.mxu0 0.0
  %672 = vmatpush1.msra.mxu0 0.0
  %673 = vmatprep.subr.mxu0 0.0
  %674 = vmatpush1.msra.mxu0 0.0
  %675 = vmatprep.subr.mxu0 0.0
  %676 = vmatpush1.msra.mxu0 0.0
  %677 = vmatprep.subr.mxu0 0.0
  %678 = vmatpush1.msra.mxu0 0.0
  %679 = vmatprep.subr.mxu0 0.0
  %680 = vmatpush1.msra.mxu0 0.0
  %681 = vmatprep.subr.mxu0 0.0
  %682 = vmatpush1.msra.mxu0 0.0
  %683 = vmatprep.subr.mxu0 0.0
  %684 = vmatpush1.msra.mxu0 0.0
  %685 = vmatprep.subr.mxu0 0.0
  %686 = vmatpush1.msra.mxu0 0.0
  %687 = vmatprep.subr.mxu0 0.0
  %688 = vmatpush1.msra.mxu0 0.0
  %689 = vmatprep.subr.mxu0 0.0
  %690 = vmatpush1.msra.mxu0 0.0
  %691 = vmatprep.subr.mxu0 0.0
  %692 = vmatpush1.msra.mxu0 0.0
  %693 = vmatprep.subr.mxu0 0.0
  %694 = vmatpush1.msra.mxu0 %v586
  %695 = vmatprep.subr.mxu0 0.0
  %696 = vmatpush1.msra.mxu0 %v581
  %697 = vmatprep.subr.mxu0 0.0
  %698 = vmatpush2.msra.mxu0 0.0
  %699 = vmatprep.subr.mxu0 0.0
  %700 = vmatpush2.msra.mxu0 0.0
  %701 = vmatprep.subr.mxu0 0.0
  %702 = vmatpush2.msra.mxu0 0.0
  %703 = vmatprep.subr.mxu0 0.0
  %704 = vmatpush2.msra.mxu0 0.0
  %705 = vmatprep.subr.mxu0 0.0
  %706 = vmatpush2.msra.mxu0 0.0
  %707 = vmatprep.subr.mxu0 0.0
  %708 = vmatpush2.msra.mxu0 0.0
  %709 = vmatprep.subr.mxu0 0.0
  %710 = vmatpush2.msra.mxu0 0.0
  %711 = vmatprep.subr.mxu0 0.0
  %712 = vmatpush2.msra.mxu0 0.0
  %713 = vmatprep.subr.mxu0 0.0
  %714 = vmatpush2.msra.mxu0 0.0
  %715 = vmatprep.subr.mxu0 0.0
  %716 = vmatpush2.msra.mxu0 0.0
  %717 = vmatprep.subr.mxu0 0.0
  %718 = vmatpush2.msra.mxu0 0.0
  %719 = vmatprep.subr.mxu0 0.0
  %720 = vmatpush2.msra.mxu0 0.0
  %721 = vmatprep.subr.mxu0 0.0
  %722 = vmatpush2.msra.mxu0 0.0
  %723 = vmatprep.subr.mxu0 0.0
  %724 = vmatpush2.msra.mxu0 0.0
  %725 = vmatprep.subr.mxu0 0.0
  %726 = vmatpush2.msra.mxu0 0.0
  %727 = vmatprep.subr.mxu0 0.0
  %728 = vmatpush2.msra.mxu0 0.0
  %729 = vmatprep.mubr.f32.mxu0 0.0
  %730 = vmatmul.mubr.f32.gmra.mxu0 %v663
  %v731 = vpop.f32.mrf.mxu0
  %v732 = vadd.f32 0.0, %v731
  %v733 = vpop.f32.mrf.mxu0
  %734 = vdwg.mxu0
  %v735 = vmul.f32 %v659, %v732
  %v736 = vld [vmem:[%s3 + $0x8] sm:$0xff]
  %v737 = vld [vmem:[%s3 + $0x10] sm:$0xff]
  %v738 = vld [vmem:[%s3 + $0x18] sm:$0xff]
  %v739 = vld [vmem:[%s3 + $0x20] sm:$0xff]
  %v740 = vld [vmem:[%s3 + $0x28] sm:$0xff]
  %v741 = vlaneseq
  %v742 = vshrl.u32 %v741, 7
  %v743 = vsub.s32 0, %v742
  %v744 = vrot.slane %v740, %v743
  %v746 = vsel %vm127, %v735, 0
  %748 = vmatprep.subr.mxu0 0.0
  %749 = vmatpush1.msra.mxu0 0.0
  %750 = vmatprep.subr.mxu0 0.0
  %751 = vmatpush1.msra.mxu0 0.0
  %752 = vmatprep.subr.mxu0 0.0
  %753 = vmatpush1.msra.mxu0 0.0
  %754 = vmatprep.subr.mxu0 0.0
  %755 = vmatpush1.msra.mxu0 0.0
  %756 = vmatprep.subr.mxu0 0.0
  %757 = vmatpush1.msra.mxu0 0.0
  %758 = vmatprep.subr.mxu0 0.0
  %759 = vmatpush1.msra.mxu0 0.0
  %760 = vmatprep.subr.mxu0 0.0
  %761 = vmatpush1.msra.mxu0 0.0
  %762 = vmatprep.subr.mxu0 0.0
  %763 = vmatpush1.msra.mxu0 0.0
  %764 = vmatprep.subr.mxu0 0.0
  %765 = vmatpush1.msra.mxu0 0.0
  %766 = vmatprep.subr.mxu0 0.0
  %767 = vmatpush1.msra.mxu0 0.0
  %768 = vmatprep.subr.mxu0 0.0
  %769 = vmatpush1.msra.mxu0 0.0
  %770 = vmatprep.subr.mxu0 0.0
  %771 = vmatpush1.msra.mxu0 0.0
  %772 = vmatprep.subr.mxu0 0.0
  %773 = vmatpush1.msra.mxu0 %v739
  %774 = vmatprep.subr.mxu0 0.0
  %775 = vmatpush1.msra.mxu0 %v738
  %776 = vmatprep.subr.mxu0 0.0
  %777 = vmatpush1.msra.mxu0 %v737
  %778 = vmatprep.subr.mxu0 0.0
  %779 = vmatpush1.msra.mxu0 %v736
  %780 = vmatprep.subr.mxu0 0.0
  %781 = vmatpush2.msra.mxu0 0.0
  %782 = vmatprep.subr.mxu0 0.0
  %783 = vmatpush2.msra.mxu0 0.0
  %784 = vmatprep.subr.mxu0 0.0
  %785 = vmatpush2.msra.mxu0 0.0
  %786 = vmatprep.subr.mxu0 0.0
  %787 = vmatpush2.msra.mxu0 0.0
  %788 = vmatprep.subr.mxu0 0.0
  %789 = vmatpush2.msra.mxu0 0.0
  %790 = vmatprep.subr.mxu0 0.0
  %791 = vmatpush2.msra.mxu0 0.0
  %792 = vmatprep.subr.mxu0 0.0
  %793 = vmatpush2.msra.mxu0 0.0
  %794 = vmatprep.subr.mxu0 0.0
  %795 = vmatpush2.msra.mxu0 0.0
  %796 = vmatprep.subr.mxu0 0.0
  %797 = vmatpush2.msra.mxu0 0.0
  %798 = vmatprep.subr.mxu0 0.0
  %799 = vmatpush2.msra.mxu0 0.0
  %800 = vmatprep.subr.mxu0 0.0
  %801 = vmatpush2.msra.mxu0 0.0
  %802 = vmatprep.subr.mxu0 0.0
  %803 = vmatpush2.msra.mxu0 0.0
  %804 = vmatprep.subr.mxu0 0.0
  %805 = vmatpush2.msra.mxu0 0.0
  %806 = vmatprep.subr.mxu0 0.0
  %807 = vmatpush2.msra.mxu0 0.0
  %808 = vmatprep.subr.mxu0 0.0
  %809 = vmatpush2.msra.mxu0 0.0
  %810 = vmatprep.subr.mxu0 0.0
  %811 = vmatpush2.msra.mxu0 0.0
  %812 = vmatprep.mubr.f32.mxu0 0.0
  %813 = vmatmul.mubr.f32.gmra.mxu0 %v746
  %v814 = vpop.f32.mrf.mxu0
  %v815 = vadd.f32 %v744, %v814
  %v816 = vpop.f32.mrf.mxu0
  %817 = vdwg.mxu0
  %v818 = vmax.f32 %v815, 0.0
  %v819 = vlaneseq
  %v820 = vshrl.u32 %v819, 7
  %v821 = vsub.s32 1, %v820
  %v822 = vrot.slane %v740, %v821
  %v823 = vmul.f32 %v818, %v822
  %v824 = vsel %vm127, %v823, 0.0
  %825 = vadd.xlane.f32.xlu0 %v824
  %v826 = vpop.xlane.xlu0 %825
  %v827 = vlaneseq
  %v828 = vshrl.u32 %v827, 7
  %v829 = vsub.s32 2, %v828
  %v830 = vrot.slane %v740, %v829
  %v831 = vadd.f32 %v826, %v830
  %vm832 = vcmask 7168
  %833 = vst.msk [vmem:[%s4] sm:$0xff] %vm832, %v831
  // Predicated region
  $region18: #{sage_forward.1} parent=0 // pred_check
    _
  $region19: #{sage_forward.1} parent=0 // pred_check_branch
    %835 = sbr.rel (0) target = $region21
  $region20: #{sage_forward.1} parent=0 // pred_region
    _
  $region21: #{sage_forward.1} parent=0 // pred_fallthru
    _
  // Predicated region
  $region22: #{sage_forward.1} parent=0 // pred_check
    _
  $region23: #{sage_forward.1} parent=0 // pred_check_branch
    %837 = sbr.rel (0) target = $region25
  $region24: #{sage_forward.1} parent=0 // pred_region
    _
  $region25: #{sage_forward.1} parent=0 // pred_fallthru
    _

</llo_original>
